<compile_context>
chip_gen: v5e
topology: v5e:2x2
jax: 0.10.0
libtpu: 0.0.40
codegen_flags: <defaults>
</compile_context>

<pallas_src>
import functools

import jax
import jax.numpy as jnp
from jax import lax
from jax.experimental import pallas as pl
from jax.experimental.pallas import tpu as pltpu

_LANE = 128
_SUBLANE = 8  # float32 sublane packing


def _round_up(x, m):
    return ((x + m - 1) // m) * m


def _vmem_limit_bytes():
    """Generation-aware scoped-VMEM request (leaves ~25% headroom)."""
    cap = None
    try:
        info = pltpu.get_tpu_info()
        cap = getattr(info, "vmem_capacity_bytes", None)
    except Exception:
        cap = None
    if not cap:
        cap = 64 * 1024 * 1024  # conservative fallback: v7x per-TC VMEM
    return min((cap * 3) // 4, 96 * 1024 * 1024)


def _choose_block_b(B, N, vmem_limit):
    """Largest batch tile whose padded VMEM footprint fits the budget."""
    # Padded footprint of one f32 (N, N) matrix: last two dims tile to
    # (8, 128) granules.
    tile_pad = _round_up(N, _SUBLANE) * _round_up(N, _LANE) * 4
    # Reduced sum vectors (1, N) and (N, 1) also pad to full granules.
    vec_pad = (_SUBLANE * _round_up(N, _LANE) + _round_up(N, _SUBLANE) * _LANE) * 4
    # 2x double-buffered input + 2x double-buffered output + ~2 full-tile
    # intermediates the compiler may materialize.
    per_matrix = 6 * tile_pad + vec_pad
    if per_matrix > vmem_limit:
        # TODO(synk): row-tiled large-N path (needs a cross-tile column-sum
        # reduction pass) — reject explicitly rather than spill/fail silently.
        raise NotImplementedError(
            f"N={N} needs ~{per_matrix} bytes of VMEM per matrix, "
            f"over the {vmem_limit}-byte scoped limit; row tiling not implemented.")
    block_b = max(1, vmem_limit // per_matrix)
    block_b = min(block_b, B)
    if B >= 2:
        # Keep grid >= 2 so the batch axis can shard across the two
        # TensorCores on v7x (no-op on single-TC v5e/v6e).
        block_b = min(block_b, -(-B // 2))
    return int(block_b)


def _sinkhorn_kernel(s_ref, out_ref, *, max_iter, epsilon):
    """One grid step: a (TB, N, N) block of independent score matrices.

    out_ref (f32) is the in-place accumulator, so exactly one full-tile buffer
    is live.  Each pair of Sinkhorn iterations is one read-modify-write pass:
    load tile -> column-normalize -> row-normalize (reductions taken on the
    in-flight scaled values) -> store tile.
    """
    out_ref[...] = s_ref[...] + epsilon
    if max_iter <= 0:
        return

    n_pairs = max_iter // 2

    def pair_body(_, carry):
        cur = out_ref[...]
        # Even iteration: multiply by reciprocal of column sums (sum over rows).
        col_sum = jnp.sum(cur, axis=1, keepdims=True)      # (TB, 1, N)
        scaled = cur * (1.0 / col_sum)
        # Odd iteration: row sums of the freshly scaled (in-flight) values.
        row_sum = jnp.sum(scaled, axis=2, keepdims=True)   # (TB, N, 1)
        out_ref[...] = scaled * (1.0 / row_sum)
        return carry

    if n_pairs > 0:
        lax.fori_loop(0, n_pairs, pair_body, 0)

    if max_iter % 2 == 1:
        # Trailing even (column-normalization) step for odd max_iter.
        cur = out_ref[...]
        col_sum = jnp.sum(cur, axis=1, keepdims=True)
        out_ref[...] = cur * (1.0 / col_sum)


def sinkhorn(s, max_iter=10, epsilon=1e-4, block_b=None):
    """Pallas TPU implementation of the Sinkhorn bi-stochastic layer.

    Args:
      s: (B, N, N) batch of square score matrices (cast to float32).
      max_iter: number of alternating column/row normalization steps.
      epsilon: small constant added for numerical stability.
      block_b: optional batch tile size; auto-chosen from the VMEM budget.
    Returns:
      (B, N, N) float32 approximately bi-stochastic matrices.
    """
    assert s.ndim == 3 and s.shape[1] == s.shape[2], "square matrices expected"
    B, N, _ = s.shape
    s = s.astype(jnp.float32)  # matches PyTorch default dtype=torch.float32

    vmem_limit = _vmem_limit_bytes()
    if block_b is None:
        block_b = _choose_block_b(B, N, vmem_limit)
    block_b = int(max(1, min(block_b, B)))
    grid = (pl.cdiv(B, block_b),)  # ragged tail block is fine: matrices are independent

    kernel = functools.partial(_sinkhorn_kernel, max_iter=max_iter, epsilon=epsilon)

    return pl.pallas_call(
        kernel,
        out_shape=jax.ShapeDtypeStruct((B, N, N), jnp.float32),
        grid=grid,
        in_specs=[
            pl.BlockSpec((block_b, N, N), lambda b: (b, 0, 0)),  # s
        ],
        out_specs=pl.BlockSpec((block_b, N, N), lambda b: (b, 0, 0)),
        compiler_params=pltpu.CompilerParams(
            dimension_semantics=("parallel",),
            vmem_limit_bytes=vmem_limit,
        ),
    )(s)


def _sinkhorn_reference(s, max_iter=10, epsilon=1e-4):
    """Plain-JAX transcription of the PyTorch forward (defaults, square)."""
    out = s.astype(jnp.float32) + epsilon
    for i in range(max_iter):
        if i % 2 == 1:
            ssum = jnp.sum(out, axis=2, keepdims=True)  # row sums
        else:
            ssum = jnp.sum(out, axis=1, keepdims=True)  # column sums
        out = out * (1.0 / ssum)
    return out


if __name__ == "__main__":
    key = jax.random.PRNGKey(0)
    B, N = 2, 16
    s = jax.random.uniform(key, (B, N, N), dtype=jnp.float32)

    out = sinkhorn(s, max_iter=10, epsilon=1e-4)
    out = jax.block_until_ready(out)

    ref = _sinkhorn_reference(s, max_iter=10, epsilon=1e-4)
    assert out.shape == (B, N, N)
    assert jnp.allclose(out, ref, atol=1e-5, rtol=1e-5), "mismatch vs reference"

    # Also exercise an odd iteration count + ragged batch tiling path.
    out3 = jax.block_until_ready(sinkhorn(s, max_iter=3, epsilon=1e-4, block_b=1))
    ref3 = _sinkhorn_reference(s, max_iter=3, epsilon=1e-4)
    assert jnp.allclose(out3, ref3, atol=1e-5, rtol=1e-5), "mismatch (odd max_iter)"

    print("KERNEL_OK")
</pallas_src>

<mosaic_0001>
module attributes {stable_mosaic.version = 11 : i64} {
  func.func @_sinkhorn_kernel(%arg0: i32, %arg1: memref<1x16x16xf32, #tpu.memory_space<vmem>>, %arg2: memref<1x16x16xf32, #tpu.memory_space<vmem>>) attributes {dimension_semantics = [#tpu.dimension_semantics<parallel>], iteration_bounds = array<i64: 2>, scalar_prefetch = 0 : i64, scratch_operands = 0 : i64, tpu.core_type = #tpu.core_type<tc>, window_params = [{transform_indices = @transform_0, window_bounds = array<i64: 1, 16, 16>}, {transform_indices = @transform_1, window_bounds = array<i64: 1, 16, 16>}]} {
    %c0 = arith.constant 0 : index
    %c0_0 = arith.constant 0 : index
    %c0_1 = arith.constant 0 : index
    %0 = vector.load %arg1[%c0, %c0_0, %c0_1] : memref<1x16x16xf32, #tpu.memory_space<vmem>>, vector<1x16x16xf32>
    %cst = arith.constant 9.99999974E-5 : f32
    %1 = vector.broadcast %cst : f32 to vector<1x16x16xf32>
    %2 = arith.addf %0, %1 : vector<1x16x16xf32>
    %c0_2 = arith.constant 0 : index
    %c0_3 = arith.constant 0 : index
    %c0_4 = arith.constant 0 : index
    %3 = vector.load %arg2[%c0_2, %c0_3, %c0_4] : memref<1x16x16xf32, #tpu.memory_space<vmem>>, vector<1x16x16xf32>
    tpu.vector_store %arg2[%c0_2, %c0_3, %c0_4], %2 {strides = array<i32>} : memref<1x16x16xf32, #tpu.memory_space<vmem>>, vector<1x16x16xf32>,
    %c0_i32 = arith.constant 0 : i32
    %c5_i32 = arith.constant 5 : i32
    %4 = arith.addi %c0_i32, %c5_i32 : i32
    %c1_i32 = arith.constant 1 : i32
    scf.for %arg3 = %c0_i32 to %4 step %c1_i32  : i32 {
      %c0_5 = arith.constant 0 : index
      %c0_6 = arith.constant 0 : index
      %c0_7 = arith.constant 0 : index
      %5 = vector.load %arg2[%c0_5, %c0_6, %c0_7] : memref<1x16x16xf32, #tpu.memory_space<vmem>>, vector<1x16x16xf32>
      %cst_8 = arith.constant dense<0.000000e+00> : vector<1x16xf32>
      %6 = vector.multi_reduction <add>, %5, %cst_8 [1] : vector<1x16x16xf32> to vector<1x16xf32>
      %7 = vector.shape_cast %6 : vector<1x16xf32> to vector<1x1x16xf32>
      %cst_9 = arith.constant 1.000000e+00 : f32
      %8 = vector.broadcast %cst_9 : f32 to vector<1x1x16xf32>
      %9 = arith.divf %8, %7 : vector<1x1x16xf32>
      %10 = vector.broadcast %9 : vector<1x1x16xf32> to vector<1x16x16xf32>
      %11 = arith.mulf %5, %10 : vector<1x16x16xf32>
      %cst_10 = arith.constant dense<0.000000e+00> : vector<1x16xf32>
      %12 = vector.multi_reduction <add>, %11, %cst_10 [2] : vector<1x16x16xf32> to vector<1x16xf32>
      %13 = vector.shape_cast %12 : vector<1x16xf32> to vector<1x16x1xf32>
      %cst_11 = arith.constant 1.000000e+00 : f32
      %14 = vector.broadcast %cst_11 : f32 to vector<1x16x1xf32>
      %15 = arith.divf %14, %13 : vector<1x16x1xf32>
      %16 = vector.broadcast %15 : vector<1x16x1xf32> to vector<1x16x16xf32>
      %17 = arith.mulf %11, %16 : vector<1x16x16xf32>
      %c0_12 = arith.constant 0 : index
      %c0_13 = arith.constant 0 : index
      %c0_14 = arith.constant 0 : index
      %18 = vector.load %arg2[%c0_12, %c0_13, %c0_14] : memref<1x16x16xf32, #tpu.memory_space<vmem>>, vector<1x16x16xf32>
      tpu.vector_store %arg2[%c0_12, %c0_13, %c0_14], %17 {strides = array<i32>} : memref<1x16x16xf32, #tpu.memory_space<vmem>>, vector<1x16x16xf32>,
    }
    return
  }
  func.func @transform_0(%arg0: i32) -> (i32, i32, i32) {
    %c0_i32 = arith.constant 0 : i32
    %c0_i32_0 = arith.constant 0 : i32
    %c0_i32_1 = arith.constant 0 : i32
    return %arg0, %c0_i32, %c0_i32_0 : i32, i32, i32
  }
  func.func @transform_1(%arg0: i32) -> (i32, i32, i32) {
    %c0_i32 = arith.constant 0 : i32
    %c0_i32_0 = arith.constant 0 : i32
    %c0_i32_1 = arith.constant 0 : i32
    return %arg0, %c0_i32, %c0_i32_0 : i32, i32, i32
  }
}

</mosaic_0001>

<llo_original>
// kernel: tpu_custom_call.1
$region0: #{tpu_custom_call.1}
  #allocation0 [shape = 'u32[]', space=smem, size = 0x4, offset = 0x4, fixed_abs, tag = 'smem constant byte address 0x4 - core index']
  #allocation1 [shape = 'u32[72,128]{1,0:T(1,128)}', space=vmem, size = 0x9000, scoped, tag = 'internal scratch']
  %s0 = inlined_call_operand.hbm [shape: f32[2,16,16], index: 0, kind: input, shape index: {}]
  %s1 = inlined_call_operand.hbm [shape: f32[2,16,16], index: 1, kind: output, shape index: {}]
  %s2 = sld [smem:[#allocation0]]
  $region48: #{tpu_custom_call.1} parent=0
    _
  %s4 = ssub.s32 1, %s2
  %s5 = scalar_select 0, %s4, %s2
  $region1: #{tpu_custom_call.1} parent=0
    #allocation2 [shape = 'u8[16384]{0}', space=vmem, size = 0x4000, scoped, tag = 'input window, operand 0']
    #allocation3 [shape = 's32[2]{0}', space=sflag, size = 0x8, scoped, tag = 'scoped memory for tpu_custom_call.1']
    #allocation4 [shape = 's32[2]{0}', space=sflag, size = 0x8, scoped, tag = 'scoped memory for tpu_custom_call.1']
    #allocation5 [shape = 'u8[16384]{0}', space=vmem, size = 0x4000, scoped, tag = 'output window, operand 0']
    %6 = vsyncpa [#allocation3], 0
    %s7 = scalar_lea.sflag [#allocation3], 1
    %8 = vsyncpa %s7, 0
    %9 = vsyncpa [#allocation4], 0
    %s10 = scalar_lea.sflag [#allocation4], 1
    %11 = vsyncpa %s10, 0
    loop: start=0, step=1, limit=4
    $region2: #{tpu_custom_call.1} parent=1 // loop_pre_header
      _
    $region3: #{tpu_custom_call.1} parent=1 // loop_header
      %s13 = sphi 0, %s17
      %p14 = scmp.ge.s32.totalorder %s13, 4
      %s23 = sphi 0, %s25
      %s26 = sphi 0, %s23
      %s27 = sphi 0, %s26
      %s43 = sphi 0, %s27
      %s49 = sphi 0, %s51
      %s52 = sphi 0, %s49
      %s53 = sphi 0, %s52
      %s69 = sphi 0, %s53
    $region4: #{tpu_custom_call.1} parent=1 // loop_header_branch
      %16 = sbr.rel (%p14) target = $region8
    $region5: #{tpu_custom_call.1} parent=1 // loop_body
      %s18 = ssub.s32 %s13, 1
      %s19 = ssub.s32 %s13, 2
      %s20 = sadd.s32 %s13, 1
      %s21 = ssub.s32 %s13, %s20
      %p22 = scmp.eq.s32.totalorder %s21, 0
      %s24 = sadd.s32 %s23, 1
      %s25 = scalar_select %p22, %s23, %s24
      %p28 = pneg %p22
      %p29 = scmp.eq.s32.totalorder %s13, 1
      %p30 = por %p28, %p29
      %p31 = scmp.ne.s32.totalorder %s23, %s26
      %p32 = scmp.eq.s32.totalorder %s13, 0
      %p33 = por %p31, %p32
      %p34 = scmp.ne.s32.totalorder %s23, %s26
      %p35 = scmp.eq.s32.totalorder %s18, 1
      %p36 = por %p34, %p35
      %p37 = scmp.ne.s32.totalorder %s26, %s27
      %p38 = scmp.eq.s32.totalorder %s18, 0
      %p39 = por %p37, %p38
      %p40 = scmp.ne.s32.totalorder %s26, %s27
      %p41 = scmp.eq.s32.totalorder %s19, 1
      %p42 = por %p40, %p41
      %p44 = scmp.ne.s32.totalorder %s27, %s43
      %p45 = scmp.eq.s32.totalorder %s19, 0
      %p46 = por %p44, %p45
      %s47 = ssub.s32 %s13, %s20
      %p48 = scmp.eq.s32.totalorder %s47, 0
      %s50 = sadd.s32 %s49, 1
      %s51 = scalar_select %p48, %s49, %s50
      %p54 = pneg %p48
      %p55 = scmp.eq.s32.totalorder %s13, 1
      %p56 = por %p54, %p55
      %p57 = scmp.ne.s32.totalorder %s49, %s52
      %p58 = scmp.eq.s32.totalorder %s13, 0
      %p59 = por %p57, %p58
      %p60 = scmp.ne.s32.totalorder %s49, %s52
      %p61 = scmp.eq.s32.totalorder %s18, 1
      %p62 = por %p60, %p61
      %p63 = scmp.ne.s32.totalorder %s52, %s53
      %p64 = scmp.eq.s32.totalorder %s18, 0
      %p65 = por %p63, %p64
      %p66 = scmp.ne.s32.totalorder %s52, %s53
      %p67 = scmp.eq.s32.totalorder %s19, 1
      %p68 = por %p66, %p67
      %p70 = scmp.ne.s32.totalorder %s53, %s69
      %p71 = scmp.eq.s32.totalorder %s19, 0
      %p72 = por %p70, %p71
      %p73 = scmp.le.s32.totalorder 1, %s13
      %p74 = scmp.lt.s32.totalorder %s13, 3
      %p75 = pnand %p73, %p74
      %p76 = pneg %p75
      // Predicated region
      $region9: #{tpu_custom_call.1} parent=5 // pred_check
        _
      $region10: #{tpu_custom_call.1} parent=5 // pred_check_branch
        %78 = sbr.rel (%p75) target = $region12
      $region11: #{tpu_custom_call.1} parent=5 // pred_region
        %s79 = ssub.s32 %s13, 1
      $region12: #{tpu_custom_call.1} parent=5 // pred_fallthru
        _
      %p80 = scmp.lt.s32.totalorder %s13, 2
      // Predicated region
      $region13: #{tpu_custom_call.1} parent=5 // pred_check
        %p81 = pneg %p80
      $region14: #{tpu_custom_call.1} parent=5 // pred_check_branch
        %83 = sbr.rel (%p81) target = $region16
      $region15: #{tpu_custom_call.1} parent=5 // pred_region
        // Predicated region
        $region17: #{tpu_custom_call.1} parent=15 // pred_check
          %p84 = pneg %p33
        $region18: #{tpu_custom_call.1} parent=15 // pred_check_branch
          %86 = sbr.rel (%p84) target = $region20
        $region19: #{tpu_custom_call.1} parent=15 // pred_region
          %s87 = sand.u32 %s23, 1
          %s88 = scalar_lea.sflag [#allocation3], %s87
          %s89 = sand.u32 %s23, 1
          %s90 = smul.addr %s89, 16
          %s91 = scalar_lea.vmem [#allocation2], %s90
          %93 = vsyncadd %s88, 0
          %s94 = smul.addr %s13, 2
          %s95 = smul.addr %s94, 8
          %s96 = scalar_lea.hbm %s0, %s95
          %s97 = sshll.u32 %s96, 4
          %s98 = int_to_ptr.hbm [resolvable:$true] %s97
          %s99 = sshll.u32 %s91, 4
          %s100 = int_to_ptr.vmem [resolvable:$true] %s99
          %105 = dma.hbm_to_vmem [thread:$0]  %s98, 256, %s100, %s88, 128, 128, 8
        $region20: #{tpu_custom_call.1} parent=15 // pred_fallthru
          _
      $region16: #{tpu_custom_call.1} parent=5 // pred_fallthru
        _
      %p106 = scmp.le.s32.totalorder 1, %s13
      %p107 = scmp.lt.s32.totalorder %s13, 3
      %p108 = pnand %p106, %p107
      %p109 = pneg %p108
      // Predicated region
      $region21: #{tpu_custom_call.1} parent=5 // pred_check
        _
      $region22: #{tpu_custom_call.1} parent=5 // pred_check_branch
        %111 = sbr.rel (%p108) target = $region24
      $region23: #{tpu_custom_call.1} parent=5 // pred_region
        %s112 = ssub.s32 %s13, 1
        %s113 = sand.u32 %s26, 1
        %s114 = scalar_lea.sflag [#allocation3], %s113
        %s115 = sand.u32 %s26, 1
        %s116 = smul.addr %s115, 16
        %s117 = scalar_lea.vmem [#allocation2], %s116
        // Predicated region
        $region25: #{tpu_custom_call.1} parent=23 // pred_check
          %p118 = pneg %p39
        $region26: #{tpu_custom_call.1} parent=23 // pred_check_branch
          %120 = sbr.rel (%p118) target = $region28
        $region27: #{tpu_custom_call.1} parent=23 // pred_region
          %122 = dma.done %s114, 256
        $region28: #{tpu_custom_call.1} parent=23 // pred_fallthru
          _
        %s123 = sand.u32 %s26, 1
        %s124 = scalar_lea.sflag [#allocation3], %s123
        %s125 = sand.u32 %s26, 1
        %s126 = smul.addr %s125, 16
        %s127 = scalar_lea.vmem [#allocation2], %s126
        %p128 = pneg %p39
        %p129 = pneg %p36
        %p130 = pneg %p65
        %p131 = pneg %p62
        %s132 = sand.u32 %s52, 1
        %s133 = scalar_lea.sflag [#allocation4], %s132
        %s134 = sand.u32 %s52, 1
        %s135 = smul.addr %s134, 16
        %s136 = scalar_lea.vmem [#allocation5], %s135
        %v137 = vld [vmem:[%s117] sm:$0xff]
        %v138 = vld [vmem:[%s117 + $0x8] sm:$0xff]
        %v139 = vadd.f32 %v137, 0.0001
        %v140 = vadd.f32 %v138, 0.0001
        %vm141 = vcmask 130048
        %142 = vst.msk [vmem:[%s136] sm:$0xff] %vm141, %v139
        %143 = vst.msk [vmem:[%s136 + $0x8] sm:$0xff] %vm141, %v140
        loop: start=0, step=1, limit=5
        $region29: #{tpu_custom_call.1} parent=23 // loop_pre_header
          _
        $region30: #{tpu_custom_call.1} parent=23 // loop_header
          %s145 = sphi 0, %s149
          %p146 = scmp.ge.s32.totalorder %s145, 5
        $region31: #{tpu_custom_call.1} parent=23 // loop_header_branch
          %148 = sbr.rel (%p146) target = $region35
        $region32: #{tpu_custom_call.1} parent=23 // loop_body
          %v150 = vld [vmem:[%s136] sm:$0xff]
          %v151 = vld [vmem:[%s136 + $0x8] sm:$0xff]
          %v152 = vsel %vm141, %v150, 0.0
          %v153 = vsel %vm141, %v151, 0.0
          %v154 = vadd.f32 %v152, %v153
          %v155 = vrot.slane %v154, 4
          %v156 = vadd.f32 %v154, %v155
          %v157 = vrot.slane %v156, 2
          %v158 = vadd.f32 %v156, %v157
          %v159 = vrot.slane %v158, 1
          %v160 = vadd.f32 %v158, %v159
          %v161 = vrcp.pop %v160
          %v162 = vmul.f32 %v160, %v161
          %v163 = vsub.f32 1.0, %v162
          %v164 = vmul.f32 %v161, %v163
          %v165 = vadd.f32 %v161, %v164
          %vm166 = vweird.f32 %v160
          %vm167 = vweird.f32 %v161
          %vm168 = vmor %vm166, %vm167
          %v169 = vsel %vm168, %v161, %v165
          %v170 = vand.u32 2147483647, %v160
          %vm171 = vcmp.eq.f32.partialorder %v170, 8.507059e+37
          %v172 = vand.u32 %v160, 2147483648
          %v173 = vor.u32 1.1754944e-38, %v172
          %v174 = vsel %vm171, %v173, %v169
          %v175 = vmul.f32 1.0, %v174
          %v176 = vmul.f32 %v150, %v175
          %v177 = vmul.f32 %v151, %v175
          %v178 = vsel %vm141, %v176, 0.0
          %179 = vadd.xlane.f32.xlu0 %v178
          %v180 = vpop.xlane.xlu0 %179
          %v181 = vsel %vm141, %v177, 0.0
          %182 = vadd.xlane.f32.xlu0 %v181
          %v183 = vpop.xlane.xlu0 %182
          %v184 = vrcp.pop %v180
          %v185 = vmul.f32 %v180, %v184
          %v186 = vsub.f32 1.0, %v185
          %v187 = vmul.f32 %v184, %v186
          %v188 = vadd.f32 %v184, %v187
          %vm189 = vweird.f32 %v180
          %vm190 = vweird.f32 %v184
          %vm191 = vmor %vm189, %vm190
          %v192 = vsel %vm191, %v184, %v188
          %v193 = vand.u32 2147483647, %v180
          %vm194 = vcmp.eq.f32.partialorder %v193, 8.507059e+37
          %v195 = vand.u32 %v180, 2147483648
          %v196 = vor.u32 1.1754944e-38, %v195
          %v197 = vsel %vm194, %v196, %v192
          %v198 = vmul.f32 1.0, %v197
          %v199 = vrcp.pop %v183
          %v200 = vmul.f32 %v183, %v199
          %v201 = vsub.f32 1.0, %v200
          %v202 = vmul.f32 %v199, %v201
          %v203 = vadd.f32 %v199, %v202
          %vm204 = vweird.f32 %v183
          %vm205 = vweird.f32 %v199
          %vm206 = vmor %vm204, %vm205
          %v207 = vsel %vm206, %v199, %v203
          %v208 = vand.u32 2147483647, %v183
          %vm209 = vcmp.eq.f32.partialorder %v208, 8.507059e+37
          %v210 = vand.u32 %v183, 2147483648
          %v211 = vor.u32 1.1754944e-38, %v210
          %v212 = vsel %vm209, %v211, %v207
          %v213 = vmul.f32 1.0, %v212
          %v214 = vmul.f32 %v176, %v198
          %v215 = vmul.f32 %v177, %v213
          %216 = vst.msk [vmem:[%s136] sm:$0xff] %vm141, %v214
          %217 = vst.msk [vmem:[%s136 + $0x8] sm:$0xff] %vm141, %v215
        $region33: #{tpu_custom_call.1} parent=23 // loop_footer
          %s149 = sadd.s32 1, %s145
        $region34: #{tpu_custom_call.1} parent=23 // loop_footer_branch
          %144 = sbr.rel target = $region30
        $region35: #{tpu_custom_call.1} parent=23 // loop_exit
          _
        %s218 = sand.u32 %s52, 1
        %s219 = scalar_lea.sflag [#allocation4], %s218
        %s220 = sand.u32 %s52, 1
        %s221 = smul.addr %s220, 16
        %s222 = scalar_lea.vmem [#allocation5], %s221
        // Predicated region
        $region36: #{tpu_custom_call.1} parent=23 // pred_check
          %p223 = pneg %p62
        $region37: #{tpu_custom_call.1} parent=23 // pred_check_branch
          %225 = sbr.rel (%p223) target = $region39
        $region38: #{tpu_custom_call.1} parent=23 // pred_region
          %227 = vsyncadd %s219, 0
          %s228 = smul.addr %s18, 2
          %s229 = smul.addr %s228, 8
          %s230 = scalar_lea.hbm %s1, %s229
          %s231 = sshll.u32 %s222, 4
          %s232 = int_to_ptr.vmem [resolvable:$true] %s231
          %s233 = sshll.u32 %s230, 4
          %s234 = int_to_ptr.hbm [resolvable:$true] %s233
          %239 = dma.vmem_to_hbm [thread:$0]  %s232, 256, %s234, %s219, 128, 128, 8
        $region39: #{tpu_custom_call.1} parent=23 // pred_fallthru
          _
      $region24: #{tpu_custom_call.1} parent=5 // pred_fallthru
        _
      %p240 = scmp.le.s32.totalorder 2, %s13
      // Predicated region
      $region40: #{tpu_custom_call.1} parent=5 // pred_check
        %p241 = pneg %p240
      $region41: #{tpu_custom_call.1} parent=5 // pred_check_branch
        %243 = sbr.rel (%p241) target = $region43
      $region42: #{tpu_custom_call.1} parent=5 // pred_region
        %s244 = ssub.s32 %s13, 2
        // Predicated region
        $region44: #{tpu_custom_call.1} parent=42 // pred_check
          %p245 = pneg %p68
        $region45: #{tpu_custom_call.1} parent=42 // pred_check_branch
          %247 = sbr.rel (%p245) target = $region47
        $region46: #{tpu_custom_call.1} parent=42 // pred_region
          %s248 = sand.u32 %s53, 1
          %s249 = scalar_lea.sflag [#allocation4], %s248
          %s250 = sand.u32 %s53, 1
          %s251 = smul.addr %s250, 16
          %s252 = scalar_lea.vmem [#allocation5], %s251
          %254 = dma.done %s249, 256
        $region47: #{tpu_custom_call.1} parent=42 // pred_fallthru
          _
      $region43: #{tpu_custom_call.1} parent=5 // pred_fallthru
        _
    $region6: #{tpu_custom_call.1} parent=1 // loop_footer
      %s17 = sadd.s32 1, %s13
    $region7: #{tpu_custom_call.1} parent=1 // loop_footer_branch
      %12 = sbr.rel target = $region3
    $region8: #{tpu_custom_call.1} parent=1 // loop_exit
      _
    %255 = vsyncpa [#allocation3], 1
    %s256 = scalar_lea.sflag [#allocation3], 1
    %257 = vsyncpa %s256, 1
    %258 = vsyncpa [#allocation4], 1
    %s259 = scalar_lea.sflag [#allocation4], 1
    %260 = vsyncpa %s259, 1

</llo_original>
